<compile_context>
chip_gen: v7x
topology: tpu7x:2x2x1
jax: 0.10.0
libtpu: 0.0.40
codegen_flags: <defaults>
</compile_context>

<pallas_src>
import jax
import jax.numpy as jnp
from jax.experimental import pallas as pl
from jax.experimental.pallas import tpu as pltpu

LANE = 128     # lane width / MXU edge
SUBLANE = 8    # sublane granularity


def _round_up(x, m):
    return ((x + m - 1) // m) * m


def _device_kind():
    try:
        return jax.devices()[0].device_kind.lower()
    except Exception:
        return ""


def _pick_batch_tile(kind):
    # HBM-bound kernel: big batch tiles amortize per-grid-step overhead and get
    # close to the HBM roofline; per-step VMEM footprint stays < 1 MiB on every
    # generation (well under v7x's 64 MiB).
    if "v5" in kind:
        return 512
    if "v6" in kind:
        return 1024
    return 512      # v7x / unknown


def qnetwork_kernel(x_ref, w1_ref, b1_ref, w2_ref, b2_ref, w3_ref, b3_ref,
                    out_ref, h_ref):
    # fc1 + ReLU: bf16 MXU matmul, f32 accumulate / bias / ReLU, bf16 scratch store.
    x = x_ref[...].astype(jnp.bfloat16)          # cast in-kernel; x streams unpadded
    h1 = jnp.dot(x, w1_ref[...], preferred_element_type=jnp.float32) + b1_ref[...]
    h_ref[...] = jnp.maximum(h1, 0.0).astype(jnp.bfloat16)
    # fc2 + ReLU (reuse the same bf16 VMEM scratch -> bounded live activation range).
    h2 = jnp.dot(h_ref[...], w2_ref[...],
                 preferred_element_type=jnp.float32) + b2_ref[...]
    h_ref[...] = jnp.maximum(h2, 0.0).astype(jnp.bfloat16)
    # fc3 (no activation); narrow (out_size-wide) f32 writeback.
    out_ref[...] = (jnp.dot(h_ref[...], w3_ref[...],
                            preferred_element_type=jnp.float32)
                    + b3_ref[...]).astype(out_ref.dtype)


def prepare_params(params):
    """Pad hidden dim to 128 lanes and cast weights to bf16, ONCE.

    Call this outside the hot loop (e.g. after each optimizer step) so the
    per-forward path has no pad/cast ops.  Zero padding is semantics-preserving:
    padded input/hidden columns hit zero weight rows, padded hidden units get
    bias 0 -> ReLU(0)=0 -> contribute nothing downstream.
    """
    if isinstance(params, dict) and params.get("prepared", False):
        return params
    f32, bf16 = jnp.float32, jnp.bfloat16
    w1, b1 = params["w1"], params["b1"]
    w2, b2 = params["w2"], params["b2"]
    w3, b3 = params["w3"], params["b3"]
    in_size, hidden = w1.shape
    out_size = w3.shape[1]
    hid_p = _round_up(hidden, LANE)
    w1_p = jnp.zeros((in_size, hid_p), bf16).at[:, :hidden].set(w1.astype(bf16))
    w2_p = jnp.zeros((hid_p, hid_p), bf16).at[:hidden, :hidden].set(w2.astype(bf16))
    w3_p = jnp.zeros((hid_p, out_size), bf16).at[:hidden, :].set(w3.astype(bf16))
    b1_p = jnp.zeros((1, hid_p), f32).at[:, :hidden].set(b1.reshape(1, -1).astype(f32))
    b2_p = jnp.zeros((1, hid_p), f32).at[:, :hidden].set(b2.reshape(1, -1).astype(f32))
    b3_p = b3.reshape(1, -1).astype(f32)
    return {"prepared": True,
            "in_size": in_size, "hidden": hidden, "out_size": out_size,
            "hid_p": hid_p,
            "w1": w1_p, "b1": b1_p, "w2": w2_p, "b2": b2_p,
            "w3": w3_p, "b3": b3_p}


def qnetwork_forward(x, params, *, batch_tile=None, allow_xla_small_batch=False):
    """x: [B, input_size] float32. params: raw ([in,out]-transposed f32) or
    prepare_params() output."""
    p = prepare_params(params)
    in_size, out_size, hid_p = p["in_size"], p["out_size"], p["hid_p"]
    B = x.shape[0]
    assert x.shape[1] == in_size

    # Optional small-batch fast path: at tiny B the pallas_call launch overhead
    # dwarfs the few-KFLOP of work; a plain fused XLA dot chain is faster.
    if allow_xla_small_batch and B <= 64:
        bf16, f32 = jnp.bfloat16, jnp.float32
        h = jnp.maximum(jnp.dot(x.astype(bf16), p["w1"],
                                preferred_element_type=f32) + p["b1"], 0.0)
        h = jnp.maximum(jnp.dot(h.astype(bf16), p["w2"],
                                preferred_element_type=f32) + p["b2"], 0.0)
        return (jnp.dot(h.astype(bf16), p["w3"],
                        preferred_element_type=f32) + p["b3"])[:, :out_size]

    kind = _device_kind()
    if batch_tile is None:
        batch_tile = _pick_batch_tile(kind)
    tb = min(batch_tile, _round_up(B, SUBLANE))
    steps = -(-B // tb)
    # v7x has 2 TensorCores per chip: keep >= 2 "parallel" grid steps when the
    # batch is large enough so the batch axis shards across both TCs (resident
    # weights are tiny, so per-core replication is free).
    if steps == 1 and B > 256 and not ("v5" in kind or "v6" in kind):
        steps = 2
        tb = _round_up(-(-B // steps), SUBLANE)
    b_p = tb * steps

    # Batch-only zero padding (no lane padding, no dtype change): for a
    # tile-aligned B this is a no-op and x goes straight into the kernel.
    x_p = x if b_p == B else jnp.zeros((b_p, in_size), x.dtype).at[:B].set(x)

    f32 = jnp.float32
    resident = lambda i: (0, 0)   # weights/biases: same block every step (VMEM-resident)
    batched = lambda i: (i, 0)    # x / out: stream batch tiles through the pipeline

    # Real (de-padded) traffic / flop estimate for the XLA scheduler.
    flops = 2 * b_p * (in_size * hid_p + hid_p * hid_p + hid_p * out_size)
    bytes_accessed = (
        x_p.size * x_p.dtype.itemsize
        + sum(p[k].size * p[k].dtype.itemsize
              for k in ("w1", "b1", "w2", "b2", "w3", "b3"))
        + b_p * out_size * 4)

    # TODO(synk): if xprof shows exposed input DMA on v6e, add
    # pipeline_mode=pl.Buffered(3) on the x / out BlockSpecs.
    out = pl.pallas_call(
        qnetwork_kernel,
        out_shape=jax.ShapeDtypeStruct((b_p, out_size), f32),
        grid_spec=pltpu.PrefetchScalarGridSpec(
            num_scalar_prefetch=0,
            grid=(steps,),
            in_specs=[
                pl.BlockSpec((tb, in_size), batched),       # x tile (natural width)
                pl.BlockSpec((in_size, hid_p), resident),   # w1
                pl.BlockSpec((1, hid_p), resident),         # b1
                pl.BlockSpec((hid_p, hid_p), resident),     # w2
                pl.BlockSpec((1, hid_p), resident),         # b2
                pl.BlockSpec((hid_p, out_size), resident),  # w3
                pl.BlockSpec((1, out_size), resident),      # b3
            ],
            out_specs=pl.BlockSpec((tb, out_size), batched),
            scratch_shapes=[pltpu.VMEM((tb, hid_p), jnp.bfloat16)],  # shared h1/h2
        ),
        compiler_params=pltpu.CompilerParams(
            dimension_semantics=("parallel",),
            vmem_limit_bytes=32 * 1024 * 1024,
        ),
        cost_estimate=pl.CostEstimate(
            flops=flops, transcendentals=0, bytes_accessed=bytes_accessed),
    )(x_p, p["w1"], p["b1"], p["w2"], p["b2"], p["w3"], p["b3"])

    return out if b_p == B else out[:B]


def init_params(key, input_size, hidden_size, output_size):
    """Mimics nn.Linear's uniform(-1/sqrt(fan_in), 1/sqrt(fan_in)) init.
    Weights stored transposed: [in_features, out_features]."""
    def linear(k, fan_in, fan_out):
        kw, kb = jax.random.split(k)
        bound = 1.0 / jnp.sqrt(jnp.float32(fan_in))
        w = jax.random.uniform(kw, (fan_in, fan_out), jnp.float32, -bound, bound)
        b = jax.random.uniform(kb, (1, fan_out), jnp.float32, -bound, bound)
        return w, b

    k1, k2, k3 = jax.random.split(key, 3)
    w1, b1 = linear(k1, input_size, hidden_size)
    w2, b2 = linear(k2, hidden_size, hidden_size)
    w3, b3 = linear(k3, hidden_size, output_size)
    return {"w1": w1, "b1": b1, "w2": w2, "b2": b2, "w3": w3, "b3": b3}


def qnetwork_reference(x, p):
    """Reference matching the kernel's numerics: bf16 matmul operands, f32
    accumulate/bias/ReLU (intentional numerics change vs pure-f32 nn.Linear)."""
    bf16, f32 = jnp.bfloat16, jnp.float32
    h = jnp.maximum(
        jnp.dot(x.astype(bf16), p["w1"].astype(bf16), preferred_element_type=f32)
        + p["b1"].reshape(1, -1), 0.0)
    h = jnp.maximum(
        jnp.dot(h.astype(bf16), p["w2"].astype(bf16), preferred_element_type=f32)
        + p["b2"].reshape(1, -1), 0.0)
    return (jnp.dot(h.astype(bf16), p["w3"].astype(bf16), preferred_element_type=f32)
            + p["b3"].reshape(1, -1))


if __name__ == "__main__":
    key = jax.random.PRNGKey(0)
    k_params, k_x1, k_x2 = jax.random.split(key, 3)

    input_size, hidden_size, output_size = 16, 32, 4
    params = init_params(k_params, input_size, hidden_size, output_size)
    prepared = prepare_params(params)   # hoist pad/cast out of the forward path

    # Small batch: single grid step, batch-aligned (no padding path).
    x_small = jax.random.normal(k_x1, (8, input_size), jnp.float32)
    out_small = jax.block_until_ready(qnetwork_forward(x_small, prepared))
    ref_small = qnetwork_reference(x_small, params)
    assert out_small.shape == (8, output_size)
    assert jnp.allclose(out_small, ref_small, atol=1e-2, rtol=1e-2), \
        "small-batch mismatch vs reference"

    # Larger, tile-unaligned batch: multi-step grid + batch-padding path.
    x_big = jax.random.normal(k_x2, (300, input_size), jnp.float32)
    out_big = jax.block_until_ready(
        qnetwork_forward(x_big, prepared, batch_tile=128))
    ref_big = qnetwork_reference(x_big, params)
    assert out_big.shape == (300, output_size)
    assert jnp.allclose(out_big, ref_big, atol=1e-2, rtol=1e-2), \
        "large-batch mismatch vs reference"

    print("KERNEL_OK")
</pallas_src>

<mosaic_0001>
module attributes {stable_mosaic.version = 11 : i64} {
  func.func @qnetwork_kernel(%arg0: i32, %arg1: memref<8x16xf32, #tpu.memory_space<vmem>>, %arg2: memref<16x128xbf16, #tpu.memory_space<vmem>>, %arg3: memref<1x128xf32, #tpu.memory_space<vmem>>, %arg4: memref<128x128xbf16, #tpu.memory_space<vmem>>, %arg5: memref<1x128xf32, #tpu.memory_space<vmem>>, %arg6: memref<128x4xbf16, #tpu.memory_space<vmem>>, %arg7: memref<1x4xf32, #tpu.memory_space<vmem>>, %arg8: memref<8x4xf32, #tpu.memory_space<vmem>>, %arg9: memref<8x128xbf16, #tpu.memory_space<vmem>>) attributes {dimension_semantics = [#tpu.dimension_semantics<parallel>], iteration_bounds = array<i64: 1>, scalar_prefetch = 0 : i64, scratch_operands = 1 : i64, tpu.core_type = #tpu.core_type<tc>, window_params = [{transform_indices = @transform_0, window_bounds = array<i64: 8, 16>}, {pipeline_mode = #tpu.pipeline_mode<synchronous>, transform_indices = @transform_1, window_bounds = array<i64: 16, 128>}, {pipeline_mode = #tpu.pipeline_mode<synchronous>, transform_indices = @transform_2, window_bounds = array<i64: 1, 128>}, {pipeline_mode = #tpu.pipeline_mode<synchronous>, transform_indices = @transform_3, window_bounds = array<i64: 128, 128>}, {pipeline_mode = #tpu.pipeline_mode<synchronous>, transform_indices = @transform_4, window_bounds = array<i64: 1, 128>}, {pipeline_mode = #tpu.pipeline_mode<synchronous>, transform_indices = @transform_5, window_bounds = array<i64: 128, 4>}, {pipeline_mode = #tpu.pipeline_mode<synchronous>, transform_indices = @transform_6, window_bounds = array<i64: 1, 4>}, {transform_indices = @transform_7, window_bounds = array<i64: 8, 4>}]} {
    %c0 = arith.constant 0 : index
    %c0_0 = arith.constant 0 : index
    %0 = vector.load %arg1[%c0, %c0_0] : memref<8x16xf32, #tpu.memory_space<vmem>>, vector<8x16xf32>
    %1 = arith.truncf %0 : vector<8x16xf32> to vector<8x16xbf16>
    %c0_1 = arith.constant 0 : index
    %c0_2 = arith.constant 0 : index
    %2 = vector.load %arg2[%c0_1, %c0_2] : memref<16x128xbf16, #tpu.memory_space<vmem>>, vector<16x128xbf16>
    %cst = arith.constant dense<0.000000e+00> : vector<8x128xf32>
    %3 = tpu.matmul %1, %2, %cst {dimension_numbers = #tpu.dot_dimension_numbers<[1], [0], [0], [1], [0, 0, 1, 1], [], []>} : vector<8x16xbf16>, vector<16x128xbf16>, vector<8x128xf32> -> vector<8x128xf32>
    %c0_3 = arith.constant 0 : index
    %c0_4 = arith.constant 0 : index
    %4 = vector.load %arg3[%c0_3, %c0_4] : memref<1x128xf32, #tpu.memory_space<vmem>>, vector<1x128xf32>
    %5 = vector.broadcast %4 : vector<1x128xf32> to vector<8x128xf32>
    %6 = arith.addf %3, %5 : vector<8x128xf32>
    %cst_5 = arith.constant 0.000000e+00 : f32
    %7 = vector.broadcast %cst_5 : f32 to vector<8x128xf32>
    %8 = arith.maximumf %6, %7 : vector<8x128xf32>
    %9 = arith.truncf %8 : vector<8x128xf32> to vector<8x128xbf16>
    %c0_6 = arith.constant 0 : index
    %c0_7 = arith.constant 0 : index
    %10 = vector.load %arg9[%c0_6, %c0_7] : memref<8x128xbf16, #tpu.memory_space<vmem>>, vector<8x128xbf16>
    tpu.vector_store %arg9[%c0_6, %c0_7], %9 {strides = array<i32>} : memref<8x128xbf16, #tpu.memory_space<vmem>>, vector<8x128xbf16>,
    %c0_8 = arith.constant 0 : index
    %c0_9 = arith.constant 0 : index
    %11 = vector.load %arg9[%c0_8, %c0_9] : memref<8x128xbf16, #tpu.memory_space<vmem>>, vector<8x128xbf16>
    %c0_10 = arith.constant 0 : index
    %c0_11 = arith.constant 0 : index
    %12 = vector.load %arg4[%c0_10, %c0_11] : memref<128x128xbf16, #tpu.memory_space<vmem>>, vector<128x128xbf16>
    %cst_12 = arith.constant dense<0.000000e+00> : vector<8x128xf32>
    %13 = tpu.matmul %11, %12, %cst_12 {dimension_numbers = #tpu.dot_dimension_numbers<[1], [0], [0], [1], [0, 0, 1, 1], [], []>} : vector<8x128xbf16>, vector<128x128xbf16>, vector<8x128xf32> -> vector<8x128xf32>
    %c0_13 = arith.constant 0 : index
    %c0_14 = arith.constant 0 : index
    %14 = vector.load %arg5[%c0_13, %c0_14] : memref<1x128xf32, #tpu.memory_space<vmem>>, vector<1x128xf32>
    %15 = vector.broadcast %14 : vector<1x128xf32> to vector<8x128xf32>
    %16 = arith.addf %13, %15 : vector<8x128xf32>
    %cst_15 = arith.constant 0.000000e+00 : f32
    %17 = vector.broadcast %cst_15 : f32 to vector<8x128xf32>
    %18 = arith.maximumf %16, %17 : vector<8x128xf32>
    %19 = arith.truncf %18 : vector<8x128xf32> to vector<8x128xbf16>
    %c0_16 = arith.constant 0 : index
    %c0_17 = arith.constant 0 : index
    %20 = vector.load %arg9[%c0_16, %c0_17] : memref<8x128xbf16, #tpu.memory_space<vmem>>, vector<8x128xbf16>
    tpu.vector_store %arg9[%c0_16, %c0_17], %19 {strides = array<i32>} : memref<8x128xbf16, #tpu.memory_space<vmem>>, vector<8x128xbf16>,
    %c0_18 = arith.constant 0 : index
    %c0_19 = arith.constant 0 : index
    %21 = vector.load %arg9[%c0_18, %c0_19] : memref<8x128xbf16, #tpu.memory_space<vmem>>, vector<8x128xbf16>
    %c0_20 = arith.constant 0 : index
    %c0_21 = arith.constant 0 : index
    %22 = vector.load %arg6[%c0_20, %c0_21] : memref<128x4xbf16, #tpu.memory_space<vmem>>, vector<128x4xbf16>
    %cst_22 = arith.constant dense<0.000000e+00> : vector<8x4xf32>
    %23 = tpu.matmul %21, %22, %cst_22 {dimension_numbers = #tpu.dot_dimension_numbers<[1], [0], [0], [1], [0, 0, 1, 1], [], []>} : vector<8x128xbf16>, vector<128x4xbf16>, vector<8x4xf32> -> vector<8x4xf32>
    %c0_23 = arith.constant 0 : index
    %c0_24 = arith.constant 0 : index
    %24 = vector.load %arg7[%c0_23, %c0_24] : memref<1x4xf32, #tpu.memory_space<vmem>>, vector<1x4xf32>
    %25 = vector.broadcast %24 : vector<1x4xf32> to vector<8x4xf32>
    %26 = arith.addf %23, %25 : vector<8x4xf32>
    %c0_25 = arith.constant 0 : index
    %c0_26 = arith.constant 0 : index
    %27 = vector.load %arg8[%c0_25, %c0_26] : memref<8x4xf32, #tpu.memory_space<vmem>>, vector<8x4xf32>
    tpu.vector_store %arg8[%c0_25, %c0_26], %26 {strides = array<i32>} : memref<8x4xf32, #tpu.memory_space<vmem>>, vector<8x4xf32>,
    return
  }
  func.func @transform_0(%arg0: i32) -> (i32, i32) {
    %c0_i32 = arith.constant 0 : i32
    %c0_i32_0 = arith.constant 0 : i32
    return %arg0, %c0_i32 : i32, i32
  }
  func.func @transform_1(%arg0: i32) -> (i32, i32) {
    %c0_i32 = arith.constant 0 : i32
    %c0_i32_0 = arith.constant 0 : i32
    %c0_i32_1 = arith.constant 0 : i32
    return %c0_i32, %c0_i32_0 : i32, i32
  }
  func.func @transform_2(%arg0: i32) -> (i32, i32) {
    %c0_i32 = arith.constant 0 : i32
    %c0_i32_0 = arith.constant 0 : i32
    %c0_i32_1 = arith.constant 0 : i32
    return %c0_i32, %c0_i32_0 : i32, i32
  }
  func.func @transform_3(%arg0: i32) -> (i32, i32) {
    %c0_i32 = arith.constant 0 : i32
    %c0_i32_0 = arith.constant 0 : i32
    %c0_i32_1 = arith.constant 0 : i32
    return %c0_i32, %c0_i32_0 : i32, i32
  }
  func.func @transform_4(%arg0: i32) -> (i32, i32) {
    %c0_i32 = arith.constant 0 : i32
    %c0_i32_0 = arith.constant 0 : i32
    %c0_i32_1 = arith.constant 0 : i32
    return %c0_i32, %c0_i32_0 : i32, i32
  }
  func.func @transform_5(%arg0: i32) -> (i32, i32) {
    %c0_i32 = arith.constant 0 : i32
    %c0_i32_0 = arith.constant 0 : i32
    %c0_i32_1 = arith.constant 0 : i32
    return %c0_i32, %c0_i32_0 : i32, i32
  }
  func.func @transform_6(%arg0: i32) -> (i32, i32) {
    %c0_i32 = arith.constant 0 : i32
    %c0_i32_0 = arith.constant 0 : i32
    %c0_i32_1 = arith.constant 0 : i32
    return %c0_i32, %c0_i32_0 : i32, i32
  }
  func.func @transform_7(%arg0: i32) -> (i32, i32) {
    %c0_i32 = arith.constant 0 : i32
    %c0_i32_0 = arith.constant 0 : i32
    return %arg0, %c0_i32 : i32, i32
  }
}

</mosaic_0001>

<llo_original>
// kernel: tpu_custom_call.1
$region0: #{tpu_custom_call.1}
  #allocation0 [shape = 'u32[]', space=smem, size = 0x4, offset = 0x4, fixed_abs, tag = 'smem constant byte address 0x4 - core index']
  #allocation1 [shape = 'u32[144,128]{1,0:T(1,128)}', space=vmem, size = 0x12000, scoped, tag = 'internal scratch']
  #allocation2 [shape = 'bf16[8,128]{1,0:T(8,128)(2,1)}', space=vmem, size = 0x800, scoped, tag = 'scratch operand']
  %s0 = inlined_call_operand.vmem [shape: f32[8,16], index: 0, kind: input, shape index: {}]
  %s1 = inlined_call_operand.hbm [shape: bf16[16,128], index: 1, kind: input, shape index: {}]
  %s2 = inlined_call_operand.vmem [shape: f32[1,128], index: 2, kind: input, shape index: {}]
  %s3 = inlined_call_operand.vmem [shape: bf16[128,128], index: 3, kind: input, shape index: {}]
  %s4 = inlined_call_operand.vmem [shape: f32[1,128], index: 4, kind: input, shape index: {}]
  %s5 = inlined_call_operand.vmem [shape: bf16[128,4], index: 5, kind: input, shape index: {}]
  %s6 = inlined_call_operand.vmem [shape: f32[1,4], index: 6, kind: input, shape index: {}]
  %s7 = inlined_call_operand.vmem [shape: f32[8,4], index: 7, kind: output, shape index: {}]
  %s8 = sld [smem:[#allocation0]]
  $region42: #{tpu_custom_call.1} parent=0
    _
  %s10 = ssub.s32 1, %s8
  %s11 = scalar_select 0, %s10, %s8
  $region1: #{tpu_custom_call.1} parent=0
    #allocation3 [shape = 'u8[4096]{0}', space=vmem, size = 0x1000, scoped, tag = 'input window, operand 1, single buffered']
    #allocation4 [shape = 's32[1]{0}', space=sflag, size = 0x4, scoped, tag = 'scoped memory for tpu_custom_call.1']
    %12 = vsyncpa [#allocation4], 0
    // Predicated region
    $region2: #{tpu_custom_call.1} parent=1 // pred_check
      _
    $region3: #{tpu_custom_call.1} parent=1 // pred_check_branch
      %14 = sbr.rel (0) target = $region5
    $region4: #{tpu_custom_call.1} parent=1 // pred_region
      _
    $region5: #{tpu_custom_call.1} parent=1 // pred_fallthru
      _
    // Predicated region
    $region6: #{tpu_custom_call.1} parent=1 // pred_check
      _
    $region7: #{tpu_custom_call.1} parent=1 // pred_check_branch
      %16 = sbr.rel (0) target = $region9
    $region8: #{tpu_custom_call.1} parent=1 // pred_region
      %s18 = ssub.s32 128, 128
      %19 = vsyncadd [#allocation4], %s18
      %s20 = sshll.u32 [#allocation3], 4
      %s21 = int_to_ptr.vmem [resolvable:$true] %s20
      %26 = dma.hbm_to_vmem [thread:$0]  %s1, 128, %s21, [#allocation4], 64, 64, 4
    $region9: #{tpu_custom_call.1} parent=1 // pred_fallthru
      _
    // Predicated region
    $region10: #{tpu_custom_call.1} parent=1 // pred_check
      _
    $region11: #{tpu_custom_call.1} parent=1 // pred_check_branch
      %28 = sbr.rel (0) target = $region13
    $region12: #{tpu_custom_call.1} parent=1 // pred_region
      _
    $region13: #{tpu_custom_call.1} parent=1 // pred_fallthru
      _
    // Predicated region
    $region14: #{tpu_custom_call.1} parent=1 // pred_check
      _
    $region15: #{tpu_custom_call.1} parent=1 // pred_check_branch
      %30 = sbr.rel (0) target = $region17
    $region16: #{tpu_custom_call.1} parent=1 // pred_region
      _
    $region17: #{tpu_custom_call.1} parent=1 // pred_fallthru
      _
    // Predicated region
    $region18: #{tpu_custom_call.1} parent=1 // pred_check
      _
    $region19: #{tpu_custom_call.1} parent=1 // pred_check_branch
      %32 = sbr.rel (0) target = $region21
    $region20: #{tpu_custom_call.1} parent=1 // pred_region
      _
    $region21: #{tpu_custom_call.1} parent=1 // pred_fallthru
      _
    // Predicated region
    $region22: #{tpu_custom_call.1} parent=1 // pred_check
      _
    $region23: #{tpu_custom_call.1} parent=1 // pred_check_branch
      %34 = sbr.rel (0) target = $region25
    $region24: #{tpu_custom_call.1} parent=1 // pred_region
      _
    $region25: #{tpu_custom_call.1} parent=1 // pred_fallthru
      _
    // Predicated region
    $region26: #{tpu_custom_call.1} parent=1 // pred_check
      _
    $region27: #{tpu_custom_call.1} parent=1 // pred_check_branch
      %36 = sbr.rel (0) target = $region29
    $region28: #{tpu_custom_call.1} parent=1 // pred_region
      _
    $region29: #{tpu_custom_call.1} parent=1 // pred_fallthru
      _
    // Predicated region
    $region30: #{tpu_custom_call.1} parent=1 // pred_check
      _
    $region31: #{tpu_custom_call.1} parent=1 // pred_check_branch
      %38 = sbr.rel (0) target = $region33
    $region32: #{tpu_custom_call.1} parent=1 // pred_region
      %39 = dma.done [#allocation4], 128
    $region33: #{tpu_custom_call.1} parent=1 // pred_fallthru
      _
    %v41 = vld [vmem:[%s0] sm:$0xff]
    %v42 = vpack.c.bf16 %v41, %v41
    %v43 = vld [vmem:[#allocation3] sm:$0xf]
    %v44 = vld [vmem:[#allocation3 + $0x4] sm:$0xf]
    %v45 = vld [vmem:[%s2] sm:$0x1]
    %v47 = vlaneseq
    %v48 = vshrl.u32 %v47, 7
    %v49 = vsub.s32 0, %v48
    %v50 = vrot.slane %v45, %v49
    %v54 = vunpack.c.l.b16 %v43
    %v55 = vunpack.c.l.b16 %v44
    %v56 = vpack.c.b16 %v55, %v54
    %vm58 = vcmask 130048
    %v60 = vsel %vm58, %v42, 0
    %62 = vmatprep.subr.bf16.mxu0 0
    %63 = vmatpush1.bf16.msra.mxu0 %v56
    %64 = vmatprep.subr.bf16.mxu0 0
    %65 = vmatpush1.bf16.msra.mxu0 0
    %66 = vmatprep.subr.bf16.mxu0 0
    %67 = vmatpush1.bf16.msra.mxu0 0
    %68 = vmatprep.subr.bf16.mxu0 0
    %69 = vmatpush1.bf16.msra.mxu0 0
    %70 = vmatprep.subr.bf16.mxu0 0
    %71 = vmatpush1.bf16.msra.mxu0 0
    %72 = vmatprep.subr.bf16.mxu0 0
    %73 = vmatpush1.bf16.msra.mxu0 0
    %74 = vmatprep.subr.bf16.mxu0 0
    %75 = vmatpush1.bf16.msra.mxu0 0
    %76 = vmatprep.subr.bf16.mxu0 0
    %77 = vmatpush1.bf16.msra.mxu0 0
    %78 = vmatprep.subr.bf16.mxu0 0
    %79 = vmatpush1.bf16.msra.mxu0 0
    %80 = vmatprep.subr.bf16.mxu0 0
    %81 = vmatpush1.bf16.msra.mxu0 0
    %82 = vmatprep.subr.bf16.mxu0 0
    %83 = vmatpush1.bf16.msra.mxu0 0
    %84 = vmatprep.subr.bf16.mxu0 0
    %85 = vmatpush1.bf16.msra.mxu0 0
    %86 = vmatprep.subr.bf16.mxu0 0
    %87 = vmatpush1.bf16.msra.mxu0 0
    %88 = vmatprep.subr.bf16.mxu0 0
    %89 = vmatpush1.bf16.msra.mxu0 0
    %90 = vmatprep.subr.bf16.mxu0 0
    %91 = vmatpush1.bf16.msra.mxu0 0
    %92 = vmatprep.subr.bf16.mxu0 0
    %93 = vmatpush1.bf16.msra.mxu0 0
    %94 = vmatprep.mubr.bf16.mxu0 0
    %95 = vmatmul.mubr.bf16.gmra.mrb[0].mxu0 %v60
    %v96 = vpop.f32.mrb[0].mxu0
    %v97 = vadd.f32 %v50, %v96
    %v98 = vpop.f32.mrb[0].mxu0
    %v99 = vpop.f32.mrb[0].mxu0
    %v100 = vpop.f32.mrb[0].mxu0
    %101 = vdwg.mxu0
    %v102 = vmax.f32 %v97, 0.0
    %v103 = vpack.c.bf16 %v102, %v102
    %104 = vst [vmem:[#allocation2] sm:$0xf] %v103
    %v105 = vld [vmem:[#allocation2] sm:$0xf]
    %v106 = vld [vmem:[%s3] sm:$0xf]
    %v107 = vld [vmem:[%s3 + $0x4] sm:$0xf]
    %v108 = vld [vmem:[%s3 + $0x8] sm:$0xf]
    %v109 = vld [vmem:[%s3 + $0xc] sm:$0xf]
    %v110 = vld [vmem:[%s3 + $0x10] sm:$0xf]
    %v111 = vld [vmem:[%s3 + $0x14] sm:$0xf]
    %v112 = vld [vmem:[%s3 + $0x18] sm:$0xf]
    %v113 = vld [vmem:[%s3 + $0x1c] sm:$0xf]
    %v114 = vld [vmem:[%s3 + $0x20] sm:$0xf]
    %v115 = vld [vmem:[%s3 + $0x24] sm:$0xf]
    %v116 = vld [vmem:[%s3 + $0x28] sm:$0xf]
    %v117 = vld [vmem:[%s3 + $0x2c] sm:$0xf]
    %v118 = vld [vmem:[%s3 + $0x30] sm:$0xf]
    %v119 = vld [vmem:[%s3 + $0x34] sm:$0xf]
    %v120 = vld [vmem:[%s3 + $0x38] sm:$0xf]
    %v121 = vld [vmem:[%s3 + $0x3c] sm:$0xf]
    %v122 = vld [vmem:[%s4] sm:$0x1]
    %v124 = vlaneseq
    %v125 = vshrl.u32 %v124, 7
    %v126 = vsub.s32 0, %v125
    %v127 = vrot.slane %v122, %v126
    %v145 = vunpack.c.l.b16 %v106
    %v146 = vunpack.c.l.b16 %v107
    %v147 = vunpack.c.l.b16 %v108
    %v148 = vunpack.c.l.b16 %v109
    %v149 = vunpack.c.l.b16 %v110
    %v150 = vunpack.c.l.b16 %v111
    %v151 = vunpack.c.l.b16 %v112
    %v152 = vunpack.c.l.b16 %v113
    %v153 = vunpack.c.l.b16 %v114
    %v154 = vunpack.c.l.b16 %v115
    %v155 = vunpack.c.l.b16 %v116
    %v156 = vunpack.c.l.b16 %v117
    %v157 = vunpack.c.l.b16 %v118
    %v158 = vunpack.c.l.b16 %v119
    %v159 = vunpack.c.l.b16 %v120
    %v160 = vunpack.c.l.b16 %v121
    %v161 = vpack.c.b16 %v146, %v145
    %v162 = vpack.c.b16 %v148, %v147
    %v163 = vpack.c.b16 %v150, %v149
    %v164 = vpack.c.b16 %v152, %v151
    %v165 = vpack.c.b16 %v154, %v153
    %v166 = vpack.c.b16 %v156, %v155
    %v167 = vpack.c.b16 %v158, %v157
    %v168 = vpack.c.b16 %v160, %v159
    %177 = vmatprep.subr.bf16.mxu0 0
    %178 = vmatpush1.bf16.msra.mxu0 %v161
    %179 = vmatprep.subr.bf16.mxu0 0
    %180 = vmatpush1.bf16.msra.mxu0 %v162
    %181 = vmatprep.subr.bf16.mxu0 0
    %182 = vmatpush1.bf16.msra.mxu0 %v163
    %183 = vmatprep.subr.bf16.mxu0 0
    %184 = vmatpush1.bf16.msra.mxu0 %v164
    %185 = vmatprep.subr.bf16.mxu0 0
    %186 = vmatpush1.bf16.msra.mxu0 %v165
    %187 = vmatprep.subr.bf16.mxu0 0
    %188 = vmatpush1.bf16.msra.mxu0 %v166
    %189 = vmatprep.subr.bf16.mxu0 0
    %190 = vmatpush1.bf16.msra.mxu0 %v167
    %191 = vmatprep.subr.bf16.mxu0 0
    %192 = vmatpush1.bf16.msra.mxu0 %v168
    %193 = vmatprep.subr.bf16.mxu0 0
    %194 = vmatpush1.bf16.msra.mxu0 0
    %195 = vmatprep.subr.bf16.mxu0 0
    %196 = vmatpush1.bf16.msra.mxu0 0
    %197 = vmatprep.subr.bf16.mxu0 0
    %198 = vmatpush1.bf16.msra.mxu0 0
    %199 = vmatprep.subr.bf16.mxu0 0
    %200 = vmatpush1.bf16.msra.mxu0 0
    %201 = vmatprep.subr.bf16.mxu0 0
    %202 = vmatpush1.bf16.msra.mxu0 0
    %203 = vmatprep.subr.bf16.mxu0 0
    %204 = vmatpush1.bf16.msra.mxu0 0
    %205 = vmatprep.subr.bf16.mxu0 0
    %206 = vmatpush1.bf16.msra.mxu0 0
    %207 = vmatprep.subr.bf16.mxu0 0
    %208 = vmatpush1.bf16.msra.mxu0 0
    %209 = vmatprep.mubr.bf16.mxu0 0
    %210 = vmatmul.mubr.bf16.gmra.mrb[0].mxu0 %v105
    %v211 = vpop.f32.mrb[0].mxu0
    %v212 = vadd.f32 %v127, %v211
    %v213 = vpop.f32.mrb[0].mxu0
    %v214 = vpop.f32.mrb[0].mxu0
    %v215 = vpop.f32.mrb[0].mxu0
    %216 = vdwg.mxu0
    %v217 = vmax.f32 %v212, 0.0
    %v218 = vpack.c.bf16 %v217, %v217
    %219 = vst [vmem:[#allocation2] sm:$0xf] %v218
    %v220 = vld [vmem:[#allocation2] sm:$0xf]
    %v221 = vld [vmem:[%s5] sm:$0xf]
    %v222 = vld [vmem:[%s5 + $0x4] sm:$0xf]
    %v223 = vld [vmem:[%s5 + $0x8] sm:$0xf]
    %v224 = vld [vmem:[%s5 + $0xc] sm:$0xf]
    %v225 = vld [vmem:[%s5 + $0x10] sm:$0xf]
    %v226 = vld [vmem:[%s5 + $0x14] sm:$0xf]
    %v227 = vld [vmem:[%s5 + $0x18] sm:$0xf]
    %v228 = vld [vmem:[%s5 + $0x1c] sm:$0xf]
    %v229 = vld [vmem:[%s5 + $0x20] sm:$0xf]
    %v230 = vld [vmem:[%s5 + $0x24] sm:$0xf]
    %v231 = vld [vmem:[%s5 + $0x28] sm:$0xf]
    %v232 = vld [vmem:[%s5 + $0x2c] sm:$0xf]
    %v233 = vld [vmem:[%s5 + $0x30] sm:$0xf]
    %v234 = vld [vmem:[%s5 + $0x34] sm:$0xf]
    %v235 = vld [vmem:[%s5 + $0x38] sm:$0xf]
    %v236 = vld [vmem:[%s5 + $0x3c] sm:$0xf]
    %v237 = vld [vmem:[%s6] sm:$0x1]
    %v239 = vlaneseq
    %v240 = vshrl.u32 %v239, 7
    %v241 = vsub.s32 0, %v240
    %v242 = vrot.slane %v237, %v241
    %v260 = vunpack.c.l.b16 %v221
    %v261 = vunpack.c.l.b16 %v222
    %v262 = vunpack.c.l.b16 %v223
    %v263 = vunpack.c.l.b16 %v224
    %v264 = vunpack.c.l.b16 %v225
    %v265 = vunpack.c.l.b16 %v226
    %v266 = vunpack.c.l.b16 %v227
    %v267 = vunpack.c.l.b16 %v228
    %v268 = vunpack.c.l.b16 %v229
    %v269 = vunpack.c.l.b16 %v230
    %v270 = vunpack.c.l.b16 %v231
    %v271 = vunpack.c.l.b16 %v232
    %v272 = vunpack.c.l.b16 %v233
    %v273 = vunpack.c.l.b16 %v234
    %v274 = vunpack.c.l.b16 %v235
    %v275 = vunpack.c.l.b16 %v236
    %v276 = vpack.c.b16 %v261, %v260
    %v277 = vpack.c.b16 %v263, %v262
    %v278 = vpack.c.b16 %v265, %v264
    %v279 = vpack.c.b16 %v267, %v266
    %v280 = vpack.c.b16 %v269, %v268
    %v281 = vpack.c.b16 %v271, %v270
    %v282 = vpack.c.b16 %v273, %v272
    %v283 = vpack.c.b16 %v275, %v274
    %292 = vmatprep.subr.bf16.mxu0 0
    %293 = vmatpush1.bf16.msra.mxu0 %v276
    %294 = vmatprep.subr.bf16.mxu0 0
    %295 = vmatpush1.bf16.msra.mxu0 %v277
    %296 = vmatprep.subr.bf16.mxu0 0
    %297 = vmatpush1.bf16.msra.mxu0 %v278
    %298 = vmatprep.subr.bf16.mxu0 0
    %299 = vmatpush1.bf16.msra.mxu0 %v279
    %300 = vmatprep.subr.bf16.mxu0 0
    %301 = vmatpush1.bf16.msra.mxu0 %v280
    %302 = vmatprep.subr.bf16.mxu0 0
    %303 = vmatpush1.bf16.msra.mxu0 %v281
    %304 = vmatprep.subr.bf16.mxu0 0
    %305 = vmatpush1.bf16.msra.mxu0 %v282
    %306 = vmatprep.subr.bf16.mxu0 0
    %307 = vmatpush1.bf16.msra.mxu0 %v283
    %308 = vmatprep.subr.bf16.mxu0 0
    %309 = vmatpush1.bf16.msra.mxu0 0
    %310 = vmatprep.subr.bf16.mxu0 0
    %311 = vmatpush1.bf16.msra.mxu0 0
    %312 = vmatprep.subr.bf16.mxu0 0
    %313 = vmatpush1.bf16.msra.mxu0 0
    %314 = vmatprep.subr.bf16.mxu0 0
    %315 = vmatpush1.bf16.msra.mxu0 0
    %316 = vmatprep.subr.bf16.mxu0 0
    %317 = vmatpush1.bf16.msra.mxu0 0
    %318 = vmatprep.subr.bf16.mxu0 0
    %319 = vmatpush1.bf16.msra.mxu0 0
    %320 = vmatprep.subr.bf16.mxu0 0
    %321 = vmatpush1.bf16.msra.mxu0 0
    %322 = vmatprep.subr.bf16.mxu0 0
    %323 = vmatpush1.bf16.msra.mxu0 0
    %324 = vmatprep.mubr.bf16.mxu0 0
    %325 = vmatmul.mubr.bf16.gmra.mrb[0].mxu0 %v220
    %v326 = vpop.f32.mrb[0].mxu0
    %v327 = vadd.f32 %v242, %v326
    %v328 = vpop.f32.mrb[0].mxu0
    %v329 = vpop.f32.mrb[0].mxu0
    %v330 = vpop.f32.mrb[0].mxu0
    %331 = vdwg.mxu0
    %vm332 = vcmask 31744
    %333 = vst.msk [vmem:[%s7] sm:$0xff] %vm332, %v327
    // Predicated region
    $region34: #{tpu_custom_call.1} parent=1 // pred_check
      _
    $region35: #{tpu_custom_call.1} parent=1 // pred_check_branch
      %335 = sbr.rel (0) target = $region37
    $region36: #{tpu_custom_call.1} parent=1 // pred_region
      _
    $region37: #{tpu_custom_call.1} parent=1 // pred_fallthru
      _
    // Predicated region
    $region38: #{tpu_custom_call.1} parent=1 // pred_check
      _
    $region39: #{tpu_custom_call.1} parent=1 // pred_check_branch
      %337 = sbr.rel (0) target = $region41
    $region40: #{tpu_custom_call.1} parent=1 // pred_region
      _
    $region41: #{tpu_custom_call.1} parent=1 // pred_fallthru
      _
    %338 = vsyncpa [#allocation4], 1

</llo_original>
